<compile_context>
chip_gen: v7x
topology: tpu7x:2x2x1
jax: 0.10.0
libtpu: 0.0.40
codegen_flags: <defaults>
</compile_context>

<pallas_src>
import jax
import jax.numpy as jnp
from jax.experimental import pallas as pl
from jax.experimental.pallas import tpu as pltpu


def _make_kernel(K):
    """Kernel over one (BLOCK_B, T) row-block of real + K fake streams."""

    def kernel(*refs):
        real_r_ref, real_m_ref = refs[0], refs[1]
        fake_refs = refs[2:2 + 2 * K]
        out_ref = refs[2 + 2 * K]

        rr = real_r_ref[...].astype(jnp.float32)                 # [BB, T]
        rm = real_m_ref[...].astype(jnp.float32)                 # [BB, T]

        # real part: sum_T(log(r + 1 - m) * m) / sum_T(m), kept as [BB, 1]
        real_len = jnp.sum(rm, axis=1, keepdims=True)            # [BB, 1]
        real_num = jnp.sum(jnp.log(rr + 1.0 - rm) * rm,
                           axis=1, keepdims=True)                # [BB, 1]
        per_row = real_num / real_len                            # [BB, 1]

        # fake part: (1/K) * sum_k  sum_T(log(1 - r_k) * m_k) / sum_T(m_k)
        # NOTE: no where-guard on log(1 - r) at masked positions, to match the
        # PyTorch reference bit-for-bit (it has the same 0*inf hazard).
        fake_acc = jnp.zeros_like(per_row)                       # [BB, 1]
        for k in range(K):                                       # K small & static
            fr = fake_refs[2 * k][...].astype(jnp.float32)       # [BB, T]
            fm = fake_refs[2 * k + 1][...].astype(jnp.float32)   # [BB, T]
            fl = jnp.sum(fm, axis=1, keepdims=True)              # [BB, 1]
            fn = jnp.sum(jnp.log(1.0 - fr) * fm,
                         axis=1, keepdims=True)                  # [BB, 1]
            fake_acc = fake_acc + fn / fl

        # per-row contribution; final mean + negate happen in plain JAX.
        out_ref[...] = per_row + fake_acc * (1.0 / float(K))

    return kernel


def _choose_block_b(B, T, K, itemsize, budget_bytes=12 * 1024 * 1024):
    """Largest multiple-of-8 row-block keeping double-buffered tiles in budget."""
    if B <= 8:
        return B  # full-dim block is always legal
    # (2 + 2K) streams, double-buffered by the pipeline.
    per_row_bytes = 2 * (2 + 2 * K) * T * max(int(itemsize), 1)
    bb = budget_bytes // per_row_bytes
    bb = min(bb, 512, ((B + 7) // 8) * 8)
    bb = max(8, (bb // 8) * 8)
    return int(bb)


def d_loss(real_rewards, real_masks, fake_rewards_list, fake_masks_list):
    """real_rewards/real_masks: [B, T]; fake_*_list: list of K arrays [B, T]."""
    K = len(fake_masks_list)
    B, T = real_rewards.shape
    itemsize = jnp.dtype(real_rewards.dtype).itemsize
    block_b = _choose_block_b(B, T, K, itemsize)
    grid = (pl.cdiv(B, block_b),)

    row_spec = pl.BlockSpec((block_b, T), lambda i: (i, 0))
    in_specs = [row_spec, row_spec]
    operands = [real_rewards, real_masks]
    for fr, fm in zip(fake_rewards_list, fake_masks_list):
        in_specs += [row_spec, row_spec]
        operands += [fr, fm]

    out_spec = pl.BlockSpec((block_b, 1), lambda i: (i, 0))

    total_elems = (K + 1) * B * T
    bytes_accessed = sum(int(x.size) * int(jnp.dtype(x.dtype).itemsize)
                         for x in operands) + B * 4

    # TODO(synk): if masks are guaranteed prefix masks, pass per-row lengths via
    # PrefetchScalarGridSpec and rebuild masks in-kernel to halve HBM traffic.
    per_row = pl.pallas_call(
        _make_kernel(K),
        out_shape=jax.ShapeDtypeStruct((B, 1), jnp.float32),
        grid=grid,
        in_specs=in_specs,
        out_specs=out_spec,
        compiler_params=pltpu.CompilerParams(
            dimension_semantics=("parallel",),
            vmem_limit_bytes=48 * 1024 * 1024,
        ),
        cost_estimate=pl.CostEstimate(
            flops=6 * total_elems,
            transcendentals=total_elems,
            bytes_accessed=bytes_accessed,
        ),
    )(*operands)

    # Tiny finish in plain JAX: mean over B and negate.
    return -jnp.mean(per_row)


def d_loss_ref(real_rewards, real_masks, fake_rewards_list, fake_masks_list):
    """Pure-JAX reference mirroring the PyTorch forward exactly."""
    K = len(fake_masks_list)
    real_lengths = jnp.sum(real_masks, axis=1)
    real_loss = jnp.mean(
        jnp.sum(jnp.log(real_rewards + 1.0 - real_masks) * real_masks, axis=1)
        / real_lengths
    )
    fake_sum = 0.0
    for i in range(K):
        fake_length = jnp.sum(fake_masks_list[i], axis=1)
        fake_sum = fake_sum + (
            jnp.sum(jnp.log(1.0 - fake_rewards_list[i]) * fake_masks_list[i], axis=1)
            / fake_length
        )
    final_fake_loss = jnp.mean(fake_sum / K)
    return -(final_fake_loss + real_loss)


if __name__ == "__main__":
    key = jax.random.PRNGKey(0)
    B, T, K = 4, 16, 3

    k_rr, k_fr = jax.random.split(key)

    # rewards in (0, 1), bounded away from 0/1 so logs are finite
    real_rewards = jax.random.uniform(k_rr, (B, T), jnp.float32, 0.05, 0.95)
    fake_rewards_list = [
        jax.random.uniform(jax.random.fold_in(k_fr, i), (B, T), jnp.float32, 0.05, 0.95)
        for i in range(K)
    ]

    # masks: row b has (b + 5) / (b + 3 + i) valid positions (>=1 per row)
    pos = jnp.arange(T)[None, :]                        # [1, T]
    real_lengths = (jnp.arange(B) + 5)[:, None]         # [B, 1]
    real_masks = (pos < real_lengths).astype(jnp.float32)
    fake_masks_list = [
        (pos < (jnp.arange(B) + 3 + i)[:, None]).astype(jnp.float32)
        for i in range(K)
    ]

    out = d_loss(real_rewards, real_masks, fake_rewards_list, fake_masks_list)
    out = jax.block_until_ready(out)

    ref = d_loss_ref(real_rewards, real_masks, fake_rewards_list, fake_masks_list)
    assert jnp.allclose(out, ref, rtol=1e-5, atol=1e-5), (out, ref)

    print("KERNEL_OK")
</pallas_src>

<mosaic_0001>
module attributes {stable_mosaic.version = 11 : i64} {
  func.func @kernel(%arg0: i32, %arg1: memref<4x16xf32, #tpu.memory_space<vmem>>, %arg2: memref<4x16xf32, #tpu.memory_space<vmem>>, %arg3: memref<4x16xf32, #tpu.memory_space<vmem>>, %arg4: memref<4x16xf32, #tpu.memory_space<vmem>>, %arg5: memref<4x16xf32, #tpu.memory_space<vmem>>, %arg6: memref<4x16xf32, #tpu.memory_space<vmem>>, %arg7: memref<4x16xf32, #tpu.memory_space<vmem>>, %arg8: memref<4x16xf32, #tpu.memory_space<vmem>>, %arg9: memref<4x1xf32, #tpu.memory_space<vmem>>) attributes {dimension_semantics = [#tpu.dimension_semantics<parallel>], iteration_bounds = array<i64: 1>, scalar_prefetch = 0 : i64, scratch_operands = 0 : i64, tpu.core_type = #tpu.core_type<tc>, window_params = [{transform_indices = @transform_0, window_bounds = array<i64: 4, 16>}, {transform_indices = @transform_1, window_bounds = array<i64: 4, 16>}, {transform_indices = @transform_2, window_bounds = array<i64: 4, 16>}, {transform_indices = @transform_3, window_bounds = array<i64: 4, 16>}, {transform_indices = @transform_4, window_bounds = array<i64: 4, 16>}, {transform_indices = @transform_5, window_bounds = array<i64: 4, 16>}, {transform_indices = @transform_6, window_bounds = array<i64: 4, 16>}, {transform_indices = @transform_7, window_bounds = array<i64: 4, 16>}, {transform_indices = @transform_8, window_bounds = array<i64: 4, 1>}]} {
    %c0 = arith.constant 0 : index
    %c0_0 = arith.constant 0 : index
    %0 = vector.load %arg1[%c0, %c0_0] : memref<4x16xf32, #tpu.memory_space<vmem>>, vector<4x16xf32>
    %c0_1 = arith.constant 0 : index
    %c0_2 = arith.constant 0 : index
    %1 = vector.load %arg2[%c0_1, %c0_2] : memref<4x16xf32, #tpu.memory_space<vmem>>, vector<4x16xf32>
    %cst = arith.constant dense<0.000000e+00> : vector<4xf32>
    %2 = vector.multi_reduction <add>, %1, %cst [1] : vector<4x16xf32> to vector<4xf32>
    %3 = vector.shape_cast %2 : vector<4xf32> to vector<4x1xf32>
    %cst_3 = arith.constant 1.000000e+00 : f32
    %4 = vector.broadcast %cst_3 : f32 to vector<4x16xf32>
    %5 = arith.addf %0, %4 : vector<4x16xf32>
    %6 = arith.subf %5, %1 : vector<4x16xf32>
    %7 = math.log %6 : vector<4x16xf32>
    %8 = arith.mulf %7, %1 : vector<4x16xf32>
    %cst_4 = arith.constant dense<0.000000e+00> : vector<4xf32>
    %9 = vector.multi_reduction <add>, %8, %cst_4 [1] : vector<4x16xf32> to vector<4xf32>
    %10 = vector.shape_cast %9 : vector<4xf32> to vector<4x1xf32>
    %11 = arith.divf %10, %3 : vector<4x1xf32>
    %cst_5 = arith.constant 0.000000e+00 : f32
    %12 = vector.broadcast %cst_5 : f32 to vector<4x1xf32>
    %c0_6 = arith.constant 0 : index
    %c0_7 = arith.constant 0 : index
    %13 = vector.load %arg3[%c0_6, %c0_7] : memref<4x16xf32, #tpu.memory_space<vmem>>, vector<4x16xf32>
    %c0_8 = arith.constant 0 : index
    %c0_9 = arith.constant 0 : index
    %14 = vector.load %arg4[%c0_8, %c0_9] : memref<4x16xf32, #tpu.memory_space<vmem>>, vector<4x16xf32>
    %cst_10 = arith.constant dense<0.000000e+00> : vector<4xf32>
    %15 = vector.multi_reduction <add>, %14, %cst_10 [1] : vector<4x16xf32> to vector<4xf32>
    %16 = vector.shape_cast %15 : vector<4xf32> to vector<4x1xf32>
    %cst_11 = arith.constant 1.000000e+00 : f32
    %17 = vector.broadcast %cst_11 : f32 to vector<4x16xf32>
    %18 = arith.subf %17, %13 : vector<4x16xf32>
    %19 = math.log %18 : vector<4x16xf32>
    %20 = arith.mulf %19, %14 : vector<4x16xf32>
    %cst_12 = arith.constant dense<0.000000e+00> : vector<4xf32>
    %21 = vector.multi_reduction <add>, %20, %cst_12 [1] : vector<4x16xf32> to vector<4xf32>
    %22 = vector.shape_cast %21 : vector<4xf32> to vector<4x1xf32>
    %23 = arith.divf %22, %16 : vector<4x1xf32>
    %24 = arith.addf %12, %23 : vector<4x1xf32>
    %c0_13 = arith.constant 0 : index
    %c0_14 = arith.constant 0 : index
    %25 = vector.load %arg5[%c0_13, %c0_14] : memref<4x16xf32, #tpu.memory_space<vmem>>, vector<4x16xf32>
    %c0_15 = arith.constant 0 : index
    %c0_16 = arith.constant 0 : index
    %26 = vector.load %arg6[%c0_15, %c0_16] : memref<4x16xf32, #tpu.memory_space<vmem>>, vector<4x16xf32>
    %cst_17 = arith.constant dense<0.000000e+00> : vector<4xf32>
    %27 = vector.multi_reduction <add>, %26, %cst_17 [1] : vector<4x16xf32> to vector<4xf32>
    %28 = vector.shape_cast %27 : vector<4xf32> to vector<4x1xf32>
    %cst_18 = arith.constant 1.000000e+00 : f32
    %29 = vector.broadcast %cst_18 : f32 to vector<4x16xf32>
    %30 = arith.subf %29, %25 : vector<4x16xf32>
    %31 = math.log %30 : vector<4x16xf32>
    %32 = arith.mulf %31, %26 : vector<4x16xf32>
    %cst_19 = arith.constant dense<0.000000e+00> : vector<4xf32>
    %33 = vector.multi_reduction <add>, %32, %cst_19 [1] : vector<4x16xf32> to vector<4xf32>
    %34 = vector.shape_cast %33 : vector<4xf32> to vector<4x1xf32>
    %35 = arith.divf %34, %28 : vector<4x1xf32>
    %36 = arith.addf %24, %35 : vector<4x1xf32>
    %c0_20 = arith.constant 0 : index
    %c0_21 = arith.constant 0 : index
    %37 = vector.load %arg7[%c0_20, %c0_21] : memref<4x16xf32, #tpu.memory_space<vmem>>, vector<4x16xf32>
    %c0_22 = arith.constant 0 : index
    %c0_23 = arith.constant 0 : index
    %38 = vector.load %arg8[%c0_22, %c0_23] : memref<4x16xf32, #tpu.memory_space<vmem>>, vector<4x16xf32>
    %cst_24 = arith.constant dense<0.000000e+00> : vector<4xf32>
    %39 = vector.multi_reduction <add>, %38, %cst_24 [1] : vector<4x16xf32> to vector<4xf32>
    %40 = vector.shape_cast %39 : vector<4xf32> to vector<4x1xf32>
    %cst_25 = arith.constant 1.000000e+00 : f32
    %41 = vector.broadcast %cst_25 : f32 to vector<4x16xf32>
    %42 = arith.subf %41, %37 : vector<4x16xf32>
    %43 = math.log %42 : vector<4x16xf32>
    %44 = arith.mulf %43, %38 : vector<4x16xf32>
    %cst_26 = arith.constant dense<0.000000e+00> : vector<4xf32>
    %45 = vector.multi_reduction <add>, %44, %cst_26 [1] : vector<4x16xf32> to vector<4xf32>
    %46 = vector.shape_cast %45 : vector<4xf32> to vector<4x1xf32>
    %47 = arith.divf %46, %40 : vector<4x1xf32>
    %48 = arith.addf %36, %47 : vector<4x1xf32>
    %cst_27 = arith.constant 0.333333343 : f32
    %49 = vector.broadcast %cst_27 : f32 to vector<4x1xf32>
    %50 = arith.mulf %48, %49 : vector<4x1xf32>
    %51 = arith.addf %11, %50 : vector<4x1xf32>
    %c0_28 = arith.constant 0 : index
    %c0_29 = arith.constant 0 : index
    %52 = vector.load %arg9[%c0_28, %c0_29] : memref<4x1xf32, #tpu.memory_space<vmem>>, vector<4x1xf32>
    tpu.vector_store %arg9[%c0_28, %c0_29], %51 {strides = array<i32>} : memref<4x1xf32, #tpu.memory_space<vmem>>, vector<4x1xf32>,
    return
  }
  func.func @transform_0(%arg0: i32) -> (i32, i32) {
    %c0_i32 = arith.constant 0 : i32
    %c0_i32_0 = arith.constant 0 : i32
    return %arg0, %c0_i32 : i32, i32
  }
  func.func @transform_1(%arg0: i32) -> (i32, i32) {
    %c0_i32 = arith.constant 0 : i32
    %c0_i32_0 = arith.constant 0 : i32
    return %arg0, %c0_i32 : i32, i32
  }
  func.func @transform_2(%arg0: i32) -> (i32, i32) {
    %c0_i32 = arith.constant 0 : i32
    %c0_i32_0 = arith.constant 0 : i32
    return %arg0, %c0_i32 : i32, i32
  }
  func.func @transform_3(%arg0: i32) -> (i32, i32) {
    %c0_i32 = arith.constant 0 : i32
    %c0_i32_0 = arith.constant 0 : i32
    return %arg0, %c0_i32 : i32, i32
  }
  func.func @transform_4(%arg0: i32) -> (i32, i32) {
    %c0_i32 = arith.constant 0 : i32
    %c0_i32_0 = arith.constant 0 : i32
    return %arg0, %c0_i32 : i32, i32
  }
  func.func @transform_5(%arg0: i32) -> (i32, i32) {
    %c0_i32 = arith.constant 0 : i32
    %c0_i32_0 = arith.constant 0 : i32
    return %arg0, %c0_i32 : i32, i32
  }
  func.func @transform_6(%arg0: i32) -> (i32, i32) {
    %c0_i32 = arith.constant 0 : i32
    %c0_i32_0 = arith.constant 0 : i32
    return %arg0, %c0_i32 : i32, i32
  }
  func.func @transform_7(%arg0: i32) -> (i32, i32) {
    %c0_i32 = arith.constant 0 : i32
    %c0_i32_0 = arith.constant 0 : i32
    return %arg0, %c0_i32 : i32, i32
  }
  func.func @transform_8(%arg0: i32) -> (i32, i32) {
    %c0_i32 = arith.constant 0 : i32
    %c0_i32_0 = arith.constant 0 : i32
    return %arg0, %c0_i32 : i32, i32
  }
}

</mosaic_0001>

<llo_original>
// kernel: tpu_custom_call.1
$region0: #{tpu_custom_call.1}
  #allocation0 [shape = 'u32[]', space=smem, size = 0x4, offset = 0x4, fixed_abs, tag = 'smem constant byte address 0x4 - core index']
  #allocation1 [shape = 'u32[144,128]{1,0:T(1,128)}', space=vmem, size = 0x12000, scoped, tag = 'internal scratch']
  %s0 = inlined_call_operand.hbm [shape: f32[4,16], index: 0, kind: input, shape index: {}]
  %s1 = inlined_call_operand.hbm [shape: f32[4,16], index: 1, kind: input, shape index: {}]
  %s2 = inlined_call_operand.vmem [shape: f32[4,16], index: 2, kind: input, shape index: {}]
  %s3 = inlined_call_operand.vmem [shape: f32[4,16], index: 3, kind: input, shape index: {}]
  %s4 = inlined_call_operand.vmem [shape: f32[4,16], index: 4, kind: input, shape index: {}]
  %s5 = inlined_call_operand.vmem [shape: f32[4,16], index: 5, kind: input, shape index: {}]
  %s6 = inlined_call_operand.vmem [shape: f32[4,16], index: 6, kind: input, shape index: {}]
  %s7 = inlined_call_operand.vmem [shape: f32[4,16], index: 7, kind: input, shape index: {}]
  %s8 = inlined_call_operand.vmem [shape: f32[4,1], index: 8, kind: output, shape index: {}]
  %s9 = sld [smem:[#allocation0]]
  $region50: #{tpu_custom_call.1} parent=0
    _
  %s11 = ssub.s32 1, %s9
  %s12 = scalar_select 0, %s11, %s9
  $region1: #{tpu_custom_call.1} parent=0
    #allocation2 [shape = 'u8[2048]{0}', space=vmem, size = 0x800, scoped, tag = 'input window, operand 0, single buffered']
    #allocation3 [shape = 's32[1]{0}', space=sflag, size = 0x4, scoped, tag = 'scoped memory for tpu_custom_call.1']
    #allocation4 [shape = 'u8[2048]{0}', space=vmem, size = 0x800, scoped, tag = 'input window, operand 1, single buffered']
    #allocation5 [shape = 's32[1]{0}', space=sflag, size = 0x4, scoped, tag = 'scoped memory for tpu_custom_call.1']
    %13 = vsyncpa [#allocation3], 0
    %14 = vsyncpa [#allocation5], 0
    // Predicated region
    $region2: #{tpu_custom_call.1} parent=1 // pred_check
      _
    $region3: #{tpu_custom_call.1} parent=1 // pred_check_branch
      %16 = sbr.rel (0) target = $region5
    $region4: #{tpu_custom_call.1} parent=1 // pred_region
      %s18 = ssub.s32 64, 64
      %19 = vsyncadd [#allocation3], %s18
      %s21 = sshll.u32 [#allocation2], 4
      %s22 = int_to_ptr.vmem [resolvable:$true] %s21
      %24 = dma.hbm_to_vmem [thread:$0]  %s0, 64, %s22, [#allocation3]
    $region5: #{tpu_custom_call.1} parent=1 // pred_fallthru
      _
    // Predicated region
    $region6: #{tpu_custom_call.1} parent=1 // pred_check
      _
    $region7: #{tpu_custom_call.1} parent=1 // pred_check_branch
      %26 = sbr.rel (0) target = $region9
    $region8: #{tpu_custom_call.1} parent=1 // pred_region
      %s28 = ssub.s32 64, 64
      %29 = vsyncadd [#allocation5], %s28
      %s31 = sshll.u32 [#allocation4], 4
      %s32 = int_to_ptr.vmem [resolvable:$true] %s31
      %34 = dma.hbm_to_vmem [thread:$0]  %s1, 64, %s32, [#allocation5]
    $region9: #{tpu_custom_call.1} parent=1 // pred_fallthru
      _
    // Predicated region
    $region10: #{tpu_custom_call.1} parent=1 // pred_check
      _
    $region11: #{tpu_custom_call.1} parent=1 // pred_check_branch
      %36 = sbr.rel (0) target = $region13
    $region12: #{tpu_custom_call.1} parent=1 // pred_region
      _
    $region13: #{tpu_custom_call.1} parent=1 // pred_fallthru
      _
    // Predicated region
    $region14: #{tpu_custom_call.1} parent=1 // pred_check
      _
    $region15: #{tpu_custom_call.1} parent=1 // pred_check_branch
      %38 = sbr.rel (0) target = $region17
    $region16: #{tpu_custom_call.1} parent=1 // pred_region
      _
    $region17: #{tpu_custom_call.1} parent=1 // pred_fallthru
      _
    // Predicated region
    $region18: #{tpu_custom_call.1} parent=1 // pred_check
      _
    $region19: #{tpu_custom_call.1} parent=1 // pred_check_branch
      %40 = sbr.rel (0) target = $region21
    $region20: #{tpu_custom_call.1} parent=1 // pred_region
      _
    $region21: #{tpu_custom_call.1} parent=1 // pred_fallthru
      _
    // Predicated region
    $region22: #{tpu_custom_call.1} parent=1 // pred_check
      _
    $region23: #{tpu_custom_call.1} parent=1 // pred_check_branch
      %42 = sbr.rel (0) target = $region25
    $region24: #{tpu_custom_call.1} parent=1 // pred_region
      _
    $region25: #{tpu_custom_call.1} parent=1 // pred_fallthru
      _
    // Predicated region
    $region26: #{tpu_custom_call.1} parent=1 // pred_check
      _
    $region27: #{tpu_custom_call.1} parent=1 // pred_check_branch
      %44 = sbr.rel (0) target = $region29
    $region28: #{tpu_custom_call.1} parent=1 // pred_region
      _
    $region29: #{tpu_custom_call.1} parent=1 // pred_fallthru
      _
    // Predicated region
    $region30: #{tpu_custom_call.1} parent=1 // pred_check
      _
    $region31: #{tpu_custom_call.1} parent=1 // pred_check_branch
      %46 = sbr.rel (0) target = $region33
    $region32: #{tpu_custom_call.1} parent=1 // pred_region
      _
    $region33: #{tpu_custom_call.1} parent=1 // pred_fallthru
      _
    // Predicated region
    $region34: #{tpu_custom_call.1} parent=1 // pred_check
      _
    $region35: #{tpu_custom_call.1} parent=1 // pred_check_branch
      %48 = sbr.rel (0) target = $region37
    $region36: #{tpu_custom_call.1} parent=1 // pred_region
      %49 = dma.done [#allocation3], 64
    $region37: #{tpu_custom_call.1} parent=1 // pred_fallthru
      _
    // Predicated region
    $region38: #{tpu_custom_call.1} parent=1 // pred_check
      _
    $region39: #{tpu_custom_call.1} parent=1 // pred_check_branch
      %51 = sbr.rel (0) target = $region41
    $region40: #{tpu_custom_call.1} parent=1 // pred_region
      %52 = dma.done [#allocation5], 64
    $region41: #{tpu_custom_call.1} parent=1 // pred_fallthru
      _
    %v53 = vld [vmem:[#allocation2] sm:$0xf]
    %v54 = vld [vmem:[#allocation4] sm:$0xf]
    %vm55 = vcmask 125952
    %v56 = vsel %vm55, %v54, 0.0
    %57 = vadd.xlane.f32.xlu0 %v56
    %v58 = vpop.xlane.xlu0 %57
    %v59 = vadd.f32 %v53, 1.0
    %v60 = vsub.f32 %v59, %v54
    %v61 = vlog2.pop %v60
    %v62 = vmul.f32 %v61, 0.6931472
    %v63 = vmul.f32 %v62, %v54
    %v64 = vsel %vm55, %v63, 0.0
    %65 = vadd.xlane.f32.xlu0 %v64
    %v66 = vpop.xlane.xlu0 %65
    %v67 = vrcp.pop %v58
    %v68 = vmul.f32 %v66, %v67
    %v69 = vld [vmem:[%s2] sm:$0xf]
    %v70 = vld [vmem:[%s3] sm:$0xf]
    %v71 = vsel %vm55, %v70, 0.0
    %72 = vadd.xlane.f32.xlu0 %v71
    %v73 = vpop.xlane.xlu0 %72
    %v74 = vsub.f32 1.0, %v69
    %v75 = vlog2.pop %v74
    %v76 = vmul.f32 %v75, 0.6931472
    %v77 = vmul.f32 %v76, %v70
    %v78 = vsel %vm55, %v77, 0.0
    %79 = vadd.xlane.f32.xlu0 %v78
    %v80 = vpop.xlane.xlu0 %79
    %v81 = vrcp.pop %v73
    %v82 = vmul.f32 %v80, %v81
    %v83 = vadd.f32 %v82, 0.0
    %v84 = vld [vmem:[%s4] sm:$0xf]
    %v85 = vld [vmem:[%s5] sm:$0xf]
    %v86 = vsel %vm55, %v85, 0.0
    %87 = vadd.xlane.f32.xlu0 %v86
    %v88 = vpop.xlane.xlu0 %87
    %v89 = vsub.f32 1.0, %v84
    %v90 = vlog2.pop %v89
    %v91 = vmul.f32 %v90, 0.6931472
    %v92 = vmul.f32 %v91, %v85
    %v93 = vsel %vm55, %v92, 0.0
    %94 = vadd.xlane.f32.xlu0 %v93
    %v95 = vpop.xlane.xlu0 %94
    %v96 = vrcp.pop %v88
    %v97 = vmul.f32 %v95, %v96
    %v98 = vadd.f32 %v83, %v97
    %v99 = vld [vmem:[%s6] sm:$0xf]
    %v100 = vld [vmem:[%s7] sm:$0xf]
    %v101 = vsel %vm55, %v100, 0.0
    %102 = vadd.xlane.f32.xlu0 %v101
    %v103 = vpop.xlane.xlu0 %102
    %v104 = vsub.f32 1.0, %v99
    %v105 = vlog2.pop %v104
    %v106 = vmul.f32 %v105, 0.6931472
    %v107 = vmul.f32 %v106, %v100
    %v108 = vsel %vm55, %v107, 0.0
    %109 = vadd.xlane.f32.xlu0 %v108
    %v110 = vpop.xlane.xlu0 %109
    %v111 = vrcp.pop %v103
    %v112 = vmul.f32 %v110, %v111
    %v113 = vadd.f32 %v98, %v112
    %v114 = vmul.f32 %v113, 0.33333334
    %v115 = vadd.f32 %v68, %v114
    %vm116 = vcmask 3072
    %117 = vst.msk [vmem:[%s8] sm:$0xf] %vm116, %v115
    // Predicated region
    $region42: #{tpu_custom_call.1} parent=1 // pred_check
      _
    $region43: #{tpu_custom_call.1} parent=1 // pred_check_branch
      %119 = sbr.rel (0) target = $region45
    $region44: #{tpu_custom_call.1} parent=1 // pred_region
      _
    $region45: #{tpu_custom_call.1} parent=1 // pred_fallthru
      _
    // Predicated region
    $region46: #{tpu_custom_call.1} parent=1 // pred_check
      _
    $region47: #{tpu_custom_call.1} parent=1 // pred_check_branch
      %121 = sbr.rel (0) target = $region49
    $region48: #{tpu_custom_call.1} parent=1 // pred_region
      _
    $region49: #{tpu_custom_call.1} parent=1 // pred_fallthru
      _
    %122 = vsyncpa [#allocation3], 1
    %123 = vsyncpa [#allocation5], 1

</llo_original>
